<compile_context>
chip_gen: v7x
topology: tpu7x:2x2x1
jax: 0.10.0
libtpu: 0.0.40
codegen_flags: <defaults>
</compile_context>

<pallas_src>
import jax
import jax.numpy as jnp
from jax.experimental import pallas as pl
from jax.experimental.pallas import tpu as pltpu

VTILE = 1024        # vocab ids handled per grid step (8 lane-groups of 128)
T_TILE_MAX = 2048   # max token rows resident per step ((2048, 1) i32 -> 1 MiB VMEM)


def _round_up(x: int, m: int) -> int:
    return ((x + m - 1) // m) * m


def _vocab_presence_kernel(tok_ref, out_ref):
    # tok_ref: (T_TILE, 1) int32 token ids, -1 = padding.
    # out_ref: (1, 8, VTILE) float32, resident across the token grid axis.
    #          out[0, s, l] == 1.0 iff vocab id (v*VTILE + l) was matched by a
    #          token sitting at sublane position s of some 8-token chunk.
    v = pl.program_id(0)
    t = pl.program_id(1)
    vtile = out_ref.shape[2]
    n_chunks = tok_ref.shape[0] // 8

    @pl.when(t == 0)
    def _init():
        out_ref[...] = jnp.zeros_like(out_ref)

    # Vocab ids covered by this grid step, lane-dense: (1, VTILE).
    # Pad tokens (-1) never match non-negative ids; ids >= vocab_size in the
    # last tile never match valid tokens (assumed < vocab_size).
    # TODO(synk): if inputs may contain ids >= vocab_size, mask vocab_ids here.
    vocab_ids = v * vtile + jax.lax.broadcasted_iota(jnp.int32, (1, vtile), 1)

    acc = out_ref[0]  # (8, VTILE) f32 — presence carried from earlier token tiles

    def chunk_update(start, acc):
        chunk = tok_ref[pl.ds(start, 8), :]               # (8, 1) int32
        # pure-VPU OR via select (no int casts, no add tree)
        return jnp.where(chunk == vocab_ids, 1.0, acc)    # (8, VTILE) f32

    if n_chunks <= 8:
        # tiny inputs: fully static unroll
        for r in range(n_chunks):
            acc = chunk_update(r * 8, acc)
    else:
        def body(r, acc):
            start = pl.multiple_of(r * 8, 8)
            return chunk_update(start, acc)
        acc = jax.lax.fori_loop(0, n_chunks, body, acc)

    out_ref[0] = acc


def hyp_vocab_usage(token_ids: jnp.ndarray, vocab_size: int) -> jnp.ndarray:
    """token_ids: int [num_hyps, max_len], padded with -1 (real ids in
    [0, vocab_size)).  Returns scalar f32 = (#unique token ids) / vocab_size."""
    flat = token_ids.reshape(-1).astype(jnp.int32)
    t = int(flat.shape[0])

    t_block = min(T_TILE_MAX, _round_up(max(t, 8), 8))
    t_pad = _round_up(max(t, 8), t_block)
    flat = jnp.pad(flat, (0, t_pad - t), constant_values=-1)
    tok_col = flat.reshape(t_pad, 1)   # tokens on the sublane axis (vocab uses lanes)

    v_tiles = pl.cdiv(vocab_size, VTILE)
    t_tiles = t_pad // t_block

    presence8 = pl.pallas_call(
        _vocab_presence_kernel,
        out_shape=jax.ShapeDtypeStruct((v_tiles, 8, VTILE), jnp.float32),
        grid_spec=pltpu.PrefetchScalarGridSpec(
            num_scalar_prefetch=0,
            grid=(v_tiles, t_tiles),
            in_specs=[pl.BlockSpec((t_block, 1), lambda v, t: (t, 0))],
            out_specs=pl.BlockSpec((1, 8, VTILE), lambda v, t: (v, 0, 0)),
        ),
        compiler_params=pltpu.CompilerParams(
            # vocab axis has no cross-step state -> parallel (2x on v7x megacore);
            # token axis accumulates into the resident output block -> arbitrary.
            dimension_semantics=("parallel", "arbitrary"),
        ),
    )(tok_col)

    # Tiny finalize in XLA: dedup sublane classes, then count distinct ids.
    presence = jnp.max(presence8, axis=1)        # (v_tiles, VTILE), 0/1 per vocab id
    hyp_vocab_len = jnp.sum(presence)            # exact in f32 (count < 2^24)
    return hyp_vocab_len / jnp.float32(vocab_size)


if __name__ == "__main__":
    key = jax.random.PRNGKey(0)

    def reference(token_ids, vocab_size):
        # Pure-JAX reference matching the PyTorch set()-based semantics.
        valid = token_ids.reshape(-1)
        valid = valid[valid >= 0]
        return jnp.unique(valid).shape[0] / float(vocab_size)

    k1, k2 = jax.random.split(key)

    # Test 1: tiny shapes consistent with the module (num_hyps=2, max_len=8).
    vocab_size = 512
    num_hyps, max_len = 2, 8
    token_ids = jax.random.randint(
        k1, (num_hyps, max_len), 0, vocab_size, dtype=jnp.int32
    )
    token_ids = token_ids.at[1, max_len - 1].set(-1)   # exercise the pad path
    usage = jax.block_until_ready(hyp_vocab_usage(token_ids, vocab_size))
    ref = reference(token_ids, vocab_size)
    assert abs(float(usage) - float(ref)) < 1e-6, (float(usage), float(ref))

    # Test 2: multiple vocab tiles + multiple token tiles
    # (exercises the fori_loop path and cross-token-tile accumulation).
    vocab_size2 = 3000
    token_ids2 = jax.random.randint(k2, (128, 20), 0, vocab_size2, dtype=jnp.int32)
    token_ids2 = token_ids2.at[:, -1].set(-1)
    usage2 = jax.block_until_ready(hyp_vocab_usage(token_ids2, vocab_size2))
    ref2 = reference(token_ids2, vocab_size2)
    assert abs(float(usage2) - float(ref2)) < 1e-6, (float(usage2), float(ref2))

    print("KERNEL_OK")
</pallas_src>

<mosaic_0001>
module attributes {stable_mosaic.version = 11 : i64} {
  func.func @_vocab_presence_kernel(%arg0: i32, %arg1: i32, %arg2: memref<16x1xi32, #tpu.memory_space<vmem>>, %arg3: memref<1x8x1024xf32, #tpu.memory_space<vmem>>) attributes {dimension_semantics = [#tpu.dimension_semantics<parallel>, #tpu.dimension_semantics<arbitrary>], iteration_bounds = array<i64: 1, 1>, scalar_prefetch = 0 : i64, scratch_operands = 0 : i64, tpu.core_type = #tpu.core_type<tc>, window_params = [{transform_indices = @transform_0, window_bounds = array<i64: 16, 1>}, {transform_indices = @transform_1, window_bounds = array<i64: 1, 8, 1024>}]} {
    %c0_i32 = arith.constant 0 : i32
    %0 = arith.cmpi eq, %arg1, %c0_i32 : i32
    %1 = arith.extui %0 : i1 to i32
    %c0_i32_0 = arith.constant 0 : i32
    %2 = arith.cmpi ne, %1, %c0_i32_0 : i32
    scf.if %2 {
      %cst_10 = arith.constant 0.000000e+00 : f32
      %24 = vector.broadcast %cst_10 : f32 to vector<1x8x1024xf32>
      %c0_11 = arith.constant 0 : index
      %c0_12 = arith.constant 0 : index
      %c0_13 = arith.constant 0 : index
      %25 = vector.load %arg3[%c0_11, %c0_12, %c0_13] : memref<1x8x1024xf32, #tpu.memory_space<vmem>>, vector<1x8x1024xf32>
      tpu.vector_store %arg3[%c0_11, %c0_12, %c0_13], %24 {strides = array<i32>} : memref<1x8x1024xf32, #tpu.memory_space<vmem>>, vector<1x8x1024xf32>,
    } else {
    }
    %c1024_i32 = arith.constant 1024 : i32
    %3 = arith.muli %arg0, %c1024_i32 : i32
    %4 = tpu.iota {dimensions = array<i32: 1>} : vector<1x1024xi32>
    %5 = vector.broadcast %3 : i32 to vector<1x1024xi32>
    %6 = arith.addi %5, %4 : vector<1x1024xi32>
    %c0 = arith.constant 0 : index
    %c0_1 = arith.constant 0 : index
    %c0_2 = arith.constant 0 : index
    %7 = vector.load %arg3[%c0, %c0_1, %c0_2] : memref<1x8x1024xf32, #tpu.memory_space<vmem>>, vector<1x8x1024xf32>
    %8 = vector.shape_cast %7 : vector<1x8x1024xf32> to vector<8x1024xf32>
    %c0_3 = arith.constant 0 : index
    %c0_4 = arith.constant 0 : index
    %9 = vector.load %arg2[%c0_3, %c0_4] : memref<16x1xi32, #tpu.memory_space<vmem>>, vector<8x1xi32>
    %10 = vector.broadcast %9 : vector<8x1xi32> to vector<8x1024xi32>
    %11 = vector.broadcast %6 : vector<1x1024xi32> to vector<8x1024xi32>
    %12 = arith.cmpi eq, %10, %11 : vector<8x1024xi32>
    %cst = arith.constant 1.000000e+00 : f32
    %13 = vector.broadcast %cst : f32 to vector<8x1024xf32>
    %14 = arith.select %12, %13, %8 : vector<8x1024xi1>, vector<8x1024xf32>
    %c8 = arith.constant 8 : index
    %c0_5 = arith.constant 0 : index
    %15 = vector.load %arg2[%c8, %c0_5] : memref<16x1xi32, #tpu.memory_space<vmem>>, vector<8x1xi32>
    %16 = vector.broadcast %15 : vector<8x1xi32> to vector<8x1024xi32>
    %17 = vector.broadcast %6 : vector<1x1024xi32> to vector<8x1024xi32>
    %18 = arith.cmpi eq, %16, %17 : vector<8x1024xi32>
    %cst_6 = arith.constant 1.000000e+00 : f32
    %19 = vector.broadcast %cst_6 : f32 to vector<8x1024xf32>
    %20 = arith.select %18, %19, %14 : vector<8x1024xi1>, vector<8x1024xf32>
    %c0_7 = arith.constant 0 : index
    %c0_8 = arith.constant 0 : index
    %c0_9 = arith.constant 0 : index
    %21 = vector.load %arg3[%c0_7, %c0_8, %c0_9] : memref<1x8x1024xf32, #tpu.memory_space<vmem>>, vector<1x8x1024xf32>
    %22 = vector.shape_cast %21 : vector<1x8x1024xf32> to vector<8x1024xf32>
    %23 = vector.shape_cast %20 : vector<8x1024xf32> to vector<1x8x1024xf32>
    tpu.vector_store %arg3[%c0_7, %c0_8, %c0_9], %23 {strides = array<i32>} : memref<1x8x1024xf32, #tpu.memory_space<vmem>>, vector<1x8x1024xf32>,
    return
  }
  func.func @transform_0(%arg0: i32, %arg1: i32) -> (i32, i32) {
    %c0_i32 = arith.constant 0 : i32
    %c0_i32_0 = arith.constant 0 : i32
    return %arg1, %c0_i32 : i32, i32
  }
  func.func @transform_1(%arg0: i32, %arg1: i32) -> (i32, i32, i32) {
    %c0_i32 = arith.constant 0 : i32
    %c0_i32_0 = arith.constant 0 : i32
    %c0_i32_1 = arith.constant 0 : i32
    return %arg0, %c0_i32, %c0_i32_0 : i32, i32, i32
  }
}

</mosaic_0001>

<llo_original>
// kernel: tpu_custom_call.1
$region0: #{tpu_custom_call.1}
  #allocation0 [shape = 'u32[]', space=smem, size = 0x4, offset = 0x4, fixed_abs, tag = 'smem constant byte address 0x4 - core index']
  #allocation1 [shape = 'u32[144,128]{1,0:T(1,128)}', space=vmem, size = 0x12000, scoped, tag = 'internal scratch']
  %s0 = inlined_call_operand.vmem [shape: s32[16,1], index: 0, kind: input, shape index: {}]
  %s1 = inlined_call_operand.hbm [shape: f32[1,8,1024], index: 1, kind: output, shape index: {}]
  %s2 = sld [smem:[#allocation0]]
  $region18: #{tpu_custom_call.1} parent=0
    _
  %s4 = ssub.s32 1, %s2
  %s5 = scalar_select 0, %s4, %s2
  $region1: #{tpu_custom_call.1} parent=0
    #allocation2 [shape = 'u8[32768]{0}', space=vmem, size = 0x8000, scoped, tag = 'output window, operand 0, single buffered']
    #allocation3 [shape = 's32[1]{0}', space=sflag, size = 0x4, scoped, tag = 'scoped memory for tpu_custom_call.1']
    %6 = vsyncpa [#allocation3], 0
    // Predicated region
    $region2: #{tpu_custom_call.1} parent=1 // pred_check
      _
    $region3: #{tpu_custom_call.1} parent=1 // pred_check_branch
      %8 = sbr.rel (0) target = $region5
    $region4: #{tpu_custom_call.1} parent=1 // pred_region
      _
    $region5: #{tpu_custom_call.1} parent=1 // pred_fallthru
      _
    %p9 = scmp.eq.s32.totalorder 0, 0
    // Predicated region
    $region6: #{tpu_custom_call.1} parent=1 // pred_check
      %p10 = pneg %p9
    $region7: #{tpu_custom_call.1} parent=1 // pred_check_branch
      %12 = sbr.rel (%p10) target = $region9
    $region8: #{tpu_custom_call.1} parent=1 // pred_region
      %13 = vst [vmem:[#allocation2] sm:$0xff] 0.0
      %14 = vst [vmem:[#allocation2 + $0x8] sm:$0xff] 0.0
      %15 = vst [vmem:[#allocation2 + $0x10] sm:$0xff] 0.0
      %16 = vst [vmem:[#allocation2 + $0x18] sm:$0xff] 0.0
      %17 = vst [vmem:[#allocation2 + $0x20] sm:$0xff] 0.0
      %18 = vst [vmem:[#allocation2 + $0x28] sm:$0xff] 0.0
      %19 = vst [vmem:[#allocation2 + $0x30] sm:$0xff] 0.0
      %20 = vst [vmem:[#allocation2 + $0x38] sm:$0xff] 0.0
    $region9: #{tpu_custom_call.1} parent=1 // pred_fallthru
      _
    %s21 = smul.u32 0, 1024
    %v22 = vlaneseq
    %v23 = vand.u32 %v22, 127
    %v24 = vadd.s32 %v23, 128
    %v25 = vadd.s32 %v23, 256
    %v26 = vadd.s32 %v23, 384
    %v27 = vadd.s32 %v23, 512
    %v28 = vadd.s32 %v23, 640
    %v29 = vadd.s32 %v23, 768
    %v30 = vadd.s32 %v23, 896
    %v31 = vstv %s21
    %v32 = vadd.s32 %v31, %v23
    %v33 = vadd.s32 %v31, %v24
    %v34 = vadd.s32 %v31, %v25
    %v35 = vadd.s32 %v31, %v26
    %v36 = vadd.s32 %v31, %v27
    %v37 = vadd.s32 %v31, %v28
    %v38 = vadd.s32 %v31, %v29
    %v39 = vadd.s32 %v31, %v30
    %v40 = vld [vmem:[#allocation2] sm:$0xff]
    %v41 = vld [vmem:[#allocation2 + $0x8] sm:$0xff]
    %v42 = vld [vmem:[#allocation2 + $0x10] sm:$0xff]
    %v43 = vld [vmem:[#allocation2 + $0x18] sm:$0xff]
    %v44 = vld [vmem:[#allocation2 + $0x20] sm:$0xff]
    %v45 = vld [vmem:[#allocation2 + $0x28] sm:$0xff]
    %v46 = vld [vmem:[#allocation2 + $0x30] sm:$0xff]
    %v47 = vld [vmem:[#allocation2 + $0x38] sm:$0xff]
    %v48 = vld [vmem:[%s0] sm:$0xff]
    %49 = vset.pattern.permute.xlu0 0
    %50 = vperm.xlu0 %49, %v48
    %v51 = vpop.permute.xlu0 %50
    %vm52 = vcmp.eq.s32.totalorder %v51, %v32
    %vm53 = vcmp.eq.s32.totalorder %v51, %v33
    %vm54 = vcmp.eq.s32.totalorder %v51, %v34
    %vm55 = vcmp.eq.s32.totalorder %v51, %v35
    %vm56 = vcmp.eq.s32.totalorder %v51, %v36
    %vm57 = vcmp.eq.s32.totalorder %v51, %v37
    %vm58 = vcmp.eq.s32.totalorder %v51, %v38
    %vm59 = vcmp.eq.s32.totalorder %v51, %v39
    %v60 = vsel %vm52, 1.0, %v40
    %v61 = vsel %vm53, 1.0, %v41
    %v62 = vsel %vm54, 1.0, %v42
    %v63 = vsel %vm55, 1.0, %v43
    %v64 = vsel %vm56, 1.0, %v44
    %v65 = vsel %vm57, 1.0, %v45
    %v66 = vsel %vm58, 1.0, %v46
    %v67 = vsel %vm59, 1.0, %v47
    %v68 = vld [vmem:[%s0 + $0x8] sm:$0xff]
    %69 = vset.pattern.permute.xlu0 0
    %70 = vperm.xlu0 %69, %v68
    %v71 = vpop.permute.xlu0 %70
    %vm72 = vcmp.eq.s32.totalorder %v71, %v32
    %vm73 = vcmp.eq.s32.totalorder %v71, %v33
    %vm74 = vcmp.eq.s32.totalorder %v71, %v34
    %vm75 = vcmp.eq.s32.totalorder %v71, %v35
    %vm76 = vcmp.eq.s32.totalorder %v71, %v36
    %vm77 = vcmp.eq.s32.totalorder %v71, %v37
    %vm78 = vcmp.eq.s32.totalorder %v71, %v38
    %vm79 = vcmp.eq.s32.totalorder %v71, %v39
    %v80 = vsel %vm72, 1.0, %v60
    %v81 = vsel %vm73, 1.0, %v61
    %v82 = vsel %vm74, 1.0, %v62
    %v83 = vsel %vm75, 1.0, %v63
    %v84 = vsel %vm76, 1.0, %v64
    %v85 = vsel %vm77, 1.0, %v65
    %v86 = vsel %vm78, 1.0, %v66
    %v87 = vsel %vm79, 1.0, %v67
    %88 = vst [vmem:[#allocation2] sm:$0xff] %v80
    %89 = vst [vmem:[#allocation2 + $0x8] sm:$0xff] %v81
    %90 = vst [vmem:[#allocation2 + $0x10] sm:$0xff] %v82
    %91 = vst [vmem:[#allocation2 + $0x18] sm:$0xff] %v83
    %92 = vst [vmem:[#allocation2 + $0x20] sm:$0xff] %v84
    %93 = vst [vmem:[#allocation2 + $0x28] sm:$0xff] %v85
    %94 = vst [vmem:[#allocation2 + $0x30] sm:$0xff] %v86
    %95 = vst [vmem:[#allocation2 + $0x38] sm:$0xff] %v87
    // Predicated region
    $region10: #{tpu_custom_call.1} parent=1 // pred_check
      _
    $region11: #{tpu_custom_call.1} parent=1 // pred_check_branch
      %97 = sbr.rel (0) target = $region13
    $region12: #{tpu_custom_call.1} parent=1 // pred_region
      %s99 = ssub.s32 1024, 1024
      %100 = vsyncadd [#allocation3], %s99
      %s102 = sshll.u32 [#allocation2], 4
      %s103 = int_to_ptr.vmem [resolvable:$true] %s102
      %105 = dma.vmem_to_hbm [thread:$0]  %s103, 1024, %s1, [#allocation3]
    $region13: #{tpu_custom_call.1} parent=1 // pred_fallthru
      _
    // Predicated region
    $region14: #{tpu_custom_call.1} parent=1 // pred_check
      _
    $region15: #{tpu_custom_call.1} parent=1 // pred_check_branch
      %107 = sbr.rel (0) target = $region17
    $region16: #{tpu_custom_call.1} parent=1 // pred_region
      %108 = dma.done [#allocation3], 1024
    $region17: #{tpu_custom_call.1} parent=1 // pred_fallthru
      _
    %109 = vsyncpa [#allocation3], 1

</llo_original>
